<compile_context>
chip_gen: v6e
topology: v6e:2x2x1
jax: 0.10.0
libtpu: 0.0.40
codegen_flags: <defaults>
</compile_context>

<pallas_src>
import functools

import jax
import jax.numpy as jnp
from jax import lax
from jax.experimental import pallas as pl
from jax.experimental.pallas import tpu as pltpu


def _divnorm_kernel(x_ref, o_ref, *, power, smoothing_delta, inv_n):
    # x_ref block: (br, N) -- one independent row per (batch, group)
    x = x_ref[...]
    # Pass 1: per-row mean, accumulated in f32 (no full-block f32 upcast copy).
    mean = jnp.sum(x, axis=-1, keepdims=True, dtype=jnp.float32) * inv_n
    # Pass 2: centered sum of squares; elementwise chain feeds the reduction.
    sumsq = jnp.sum(jnp.square(x.astype(jnp.float32) - mean),
                    axis=-1, keepdims=True)
    # var = (delta + sum_i (x_i - mean)^2) / N
    var = (sumsq + smoothing_delta) * inv_n
    # Per-row inverse of var**power (EUP side), then one broadcast multiply.
    if power == 0.5:
        inv = lax.rsqrt(var)
    elif power == 1.0:
        inv = pl.reciprocal(var, approx=True)
    else:
        inv = jnp.exp(-power * jnp.log(var))
    # Recompute (x - mean) in the store expression instead of keeping a
    # full-block centered temp alive across the reduction.
    o_ref[...] = ((x.astype(jnp.float32) - mean) * inv).astype(o_ref.dtype)


def _round_down(v, m):
    return (v // m) * m


def _round_up(v, m):
    return -(-v // m) * m


def divisive_norm(x, *, power, grouped_dim, smoothing_delta=0.0):
    """x: (B, C, H, W) (or any (B, ...)) array. Returns same shape/dtype."""
    orig_shape = x.shape
    b = orig_shape[0]
    total = 1
    for d in orig_shape[1:]:
        total *= d
    assert total % grouped_dim == 0, "grouped_dim must divide prod(x.shape[1:])"
    n = total // grouped_dim
    rows = b * grouped_dim
    x2d = x.reshape(rows, n)

    itemsize = jnp.dtype(x.dtype).itemsize
    # Sublane packing: f32 -> 8, bf16 -> 16, 8-bit -> 32 rows per packed tile.
    align = 8 * max(1, 4 // itemsize)

    # --- generation-dependent budgets ----------------------------------------
    try:
        phys_vmem = int(pltpu.get_tpu_info().vmem_capacity_bytes)
    except Exception:  # interpret mode / unknown chip
        phys_vmem = 128 << 20
    if phys_vmem <= (64 << 20):        # v7x: 64 MiB/TC -> leave compiler headroom
        vmem_budget = 48 << 20
        target_block_bytes = 2 << 20
    else:                              # v5e / v6e: 128 MiB physical VMEM
        vmem_budget = 64 << 20
        target_block_bytes = 4 << 20

    # --- choose a packing-aligned row-block size ------------------------------
    row_bytes = n * itemsize
    rows_aligned = _round_up(rows, align)
    br = max(align, _round_down(target_block_bytes // max(row_bytes, 1), align))
    # Pipeline depth: aim for >= 8 grid steps (>= ~4 per TC under megacore),
    # but never shrink a block below ~512 KiB just to add steps.
    min_steps = 8
    steps_cap = max(align, _round_down(rows_aligned // min_steps, align))
    floor_br = max(align, _round_down((512 << 10) // max(row_bytes, 1), align))
    br = min(br, max(steps_cap, floor_br))
    br = min(br, rows_aligned)

    # --- VMEM check: double-buffered in/out blocks + f32 temps headroom ------
    def _needed(blk):
        return 2 * blk * row_bytes + 2 * blk * row_bytes + 2 * blk * n * 4

    while br > align and _needed(br) > vmem_budget:
        br = max(align, _round_down(br // 2, align))
    # TODO(synk): if even `align` rows overflow VMEM (huge N), switch to a 2-D
    # grid with the N axis "arbitrary" (carry per-row sum/sumsq in scratch,
    # finalize + apply on the last N tile) instead of raising the limit.

    grid = pl.cdiv(rows, br)           # NO wrapper pad; partial last block OK
    vmem_limit = int(min(vmem_budget, max(32 << 20, _needed(br) + (4 << 20))))

    # NOTE: if N < 128 the (rows, N) layout leaves output lanes masked
    # (vst.msk); a rows-on-lanes layout would help but only if the producer
    # can supply it without an HBM transpose.

    cost = pl.CostEstimate(
        flops=4 * rows * n,            # sub, square, reduce-acc, final mul
        transcendentals=rows,          # one rsqrt/recip/exp-log per row
        bytes_accessed=2 * rows * n * itemsize,
    )

    kernel = functools.partial(
        _divnorm_kernel,
        power=float(power),
        smoothing_delta=float(smoothing_delta),
        inv_n=1.0 / float(n),
    )

    out2d = pl.pallas_call(
        kernel,
        out_shape=jax.ShapeDtypeStruct((rows, n), x.dtype),
        grid_spec=pltpu.PrefetchScalarGridSpec(
            num_scalar_prefetch=0,
            grid=(grid,),
            in_specs=[pl.BlockSpec((br, n), lambda i: (i, 0))],
            out_specs=pl.BlockSpec((br, n), lambda i: (i, 0)),
        ),
        compiler_params=pltpu.CompilerParams(
            dimension_semantics=("parallel",),
            vmem_limit_bytes=vmem_limit,
        ),
        cost_estimate=cost,
    )(x2d)

    return out2d.reshape(orig_shape)


def _reference(x, *, power, grouped_dim, smoothing_delta=0.0):
    """Pure-JAX reference mirroring the PyTorch forward."""
    b = x.shape[0]
    g = grouped_dim
    xg = x.reshape(b, g, -1)
    xc = xg - jnp.mean(xg, axis=-1, keepdims=True)
    var = (jnp.sum(xc * xc, axis=-1, keepdims=True) + smoothing_delta) / xg.shape[-1]
    return (xc / (var ** power)).reshape(x.shape)


if __name__ == "__main__":
    # Module hyperparameters (deterministic, in-script)
    power = 0.5
    grouped_dim = 4
    smoothing_delta = 1e-5

    # Small NCHW input
    key = jax.random.PRNGKey(0)
    x = jax.random.normal(key, (2, 4, 16, 16), dtype=jnp.float32)

    out = divisive_norm(
        x, power=power, grouped_dim=grouped_dim, smoothing_delta=smoothing_delta
    )
    out = jax.block_until_ready(out)

    ref = _reference(
        x, power=power, grouped_dim=grouped_dim, smoothing_delta=smoothing_delta
    )
    assert out.shape == x.shape and out.dtype == x.dtype
    assert jnp.allclose(out, ref, atol=1e-5, rtol=1e-5)

    print("KERNEL_OK")
</pallas_src>

<mosaic_0001>
module attributes {stable_mosaic.version = 11 : i64} {
  func.func @_divnorm_kernel(%arg0: i32, %arg1: memref<8x256xf32, #tpu.memory_space<vmem>>, %arg2: memref<8x256xf32, #tpu.memory_space<vmem>>) attributes {dimension_semantics = [#tpu.dimension_semantics<parallel>], iteration_bounds = array<i64: 1>, scalar_prefetch = 0 : i64, scratch_operands = 0 : i64, tpu.core_type = #tpu.core_type<tc>, window_params = [{transform_indices = @transform_0, window_bounds = array<i64: 8, 256>}, {transform_indices = @transform_1, window_bounds = array<i64: 8, 256>}]} {
    %c0 = arith.constant 0 : index
    %c0_0 = arith.constant 0 : index
    %0 = vector.load %arg1[%c0, %c0_0] : memref<8x256xf32, #tpu.memory_space<vmem>>, vector<8x256xf32>
    %cst = arith.constant dense<0.000000e+00> : vector<8xf32>
    %1 = vector.multi_reduction <add>, %0, %cst [1] : vector<8x256xf32> to vector<8xf32>
    %2 = vector.shape_cast %1 : vector<8xf32> to vector<8x1xf32>
    %cst_1 = arith.constant 3.906250e-03 : f32
    %3 = vector.broadcast %cst_1 : f32 to vector<8x1xf32>
    %4 = arith.mulf %2, %3 : vector<8x1xf32>
    %5 = vector.broadcast %4 : vector<8x1xf32> to vector<8x256xf32>
    %6 = arith.subf %0, %5 : vector<8x256xf32>
    %7 = arith.mulf %6, %6 : vector<8x256xf32>
    %cst_2 = arith.constant dense<0.000000e+00> : vector<8xf32>
    %8 = vector.multi_reduction <add>, %7, %cst_2 [1] : vector<8x256xf32> to vector<8xf32>
    %9 = vector.shape_cast %8 : vector<8xf32> to vector<8x1xf32>
    %cst_3 = arith.constant 9.99999974E-6 : f32
    %10 = vector.broadcast %cst_3 : f32 to vector<8x1xf32>
    %11 = arith.addf %9, %10 : vector<8x1xf32>
    %cst_4 = arith.constant 3.906250e-03 : f32
    %12 = vector.broadcast %cst_4 : f32 to vector<8x1xf32>
    %13 = arith.mulf %11, %12 : vector<8x1xf32>
    %14 = math.rsqrt %13 : vector<8x1xf32>
    %15 = vector.broadcast %4 : vector<8x1xf32> to vector<8x256xf32>
    %16 = arith.subf %0, %15 : vector<8x256xf32>
    %17 = vector.broadcast %14 : vector<8x1xf32> to vector<8x256xf32>
    %18 = arith.mulf %16, %17 : vector<8x256xf32>
    %c0_5 = arith.constant 0 : index
    %c0_6 = arith.constant 0 : index
    %19 = vector.load %arg2[%c0_5, %c0_6] : memref<8x256xf32, #tpu.memory_space<vmem>>, vector<8x256xf32>
    tpu.vector_store %arg2[%c0_5, %c0_6], %18 {strides = array<i32>} : memref<8x256xf32, #tpu.memory_space<vmem>>, vector<8x256xf32>,
    return
  }
  func.func @transform_0(%arg0: i32) -> (i32, i32) {
    %c0_i32 = arith.constant 0 : i32
    %c0_i32_0 = arith.constant 0 : i32
    return %arg0, %c0_i32 : i32, i32
  }
  func.func @transform_1(%arg0: i32) -> (i32, i32) {
    %c0_i32 = arith.constant 0 : i32
    %c0_i32_0 = arith.constant 0 : i32
    return %arg0, %c0_i32 : i32, i32
  }
}

</mosaic_0001>

<llo_original>
// kernel: tpu_custom_call.1
$region0: #{tpu_custom_call.1}
  #allocation0 [shape = 'u32[]', space=smem, size = 0x4, offset = 0x4, fixed_abs, tag = 'smem constant byte address 0x4 - core index']
  #allocation1 [shape = 'u32[144,128]{1,0:T(1,128)}', space=vmem, size = 0x12000, scoped, tag = 'internal scratch']
  %s0 = inlined_call_operand.hbm [shape: f32[8,256], index: 0, kind: input, shape index: {}]
  %s1 = inlined_call_operand.hbm [shape: f32[8,256], index: 1, kind: output, shape index: {}]
  %s2 = sld [smem:[#allocation0]]
  $region18: #{tpu_custom_call.1} parent=0
    _
  %s4 = ssub.s32 1, %s2
  %s5 = scalar_select 0, %s4, %s2
  $region1: #{tpu_custom_call.1} parent=0
    #allocation2 [shape = 'u8[8192]{0}', space=vmem, size = 0x2000, scoped, tag = 'input window, operand 0, single buffered']
    #allocation3 [shape = 's32[1]{0}', space=sflag, size = 0x4, scoped, tag = 'scoped memory for tpu_custom_call.1']
    #allocation4 [shape = 's32[1]{0}', space=sflag, size = 0x4, scoped, tag = 'scoped memory for tpu_custom_call.1']
    #allocation5 [shape = 'u8[8192]{0}', space=vmem, size = 0x2000, scoped, tag = 'output window, operand 0, single buffered']
    %6 = vsyncpa [#allocation3], 0
    %7 = vsyncpa [#allocation4], 0
    // Predicated region
    $region2: #{tpu_custom_call.1} parent=1 // pred_check
      _
    $region3: #{tpu_custom_call.1} parent=1 // pred_check_branch
      %9 = sbr.rel (0) target = $region5
    $region4: #{tpu_custom_call.1} parent=1 // pred_region
      %s11 = ssub.s32 256, 256
      %12 = vsyncadd [#allocation3], %s11
      %s14 = sshll.u32 [#allocation2], 4
      %s15 = int_to_ptr.vmem [resolvable:$true] %s14
      %17 = dma.hbm_to_vmem [thread:$0]  %s0, 256, %s15, [#allocation3]
    $region5: #{tpu_custom_call.1} parent=1 // pred_fallthru
      _
    // Predicated region
    $region6: #{tpu_custom_call.1} parent=1 // pred_check
      _
    $region7: #{tpu_custom_call.1} parent=1 // pred_check_branch
      %19 = sbr.rel (0) target = $region9
    $region8: #{tpu_custom_call.1} parent=1 // pred_region
      %20 = dma.done [#allocation3], 256
    $region9: #{tpu_custom_call.1} parent=1 // pred_fallthru
      _
    %v21 = vld [vmem:[#allocation2] sm:$0xff]
    %v22 = vld [vmem:[#allocation2 + $0x8] sm:$0xff]
    %v23 = vadd.f32 %v21, %v22
    %24 = vadd.xlane.f32.xlu0 %v23
    %v25 = vpop.xlane.xlu0 %24
    %v26 = vmul.f32 %v25, 0.00390625
    %v27 = vsub.f32 %v21, %v26
    %v28 = vsub.f32 %v22, %v26
    %v29 = vmul.f32 %v27, %v27
    %v30 = vmul.f32 %v28, %v28
    %v31 = vadd.f32 %v29, %v30
    %32 = vadd.xlane.f32.xlu0 %v31
    %v33 = vpop.xlane.xlu0 %32
    %v34 = vadd.f32 %v33, 1e-05
    %v35 = vmul.f32 %v34, 0.00390625
    %v36 = vrsqrt.pop %v35
    %v37 = vmul.f32 %v27, %v36
    %v38 = vmul.f32 %v28, %v36
    %39 = vst [vmem:[#allocation5] sm:$0xff] %v37
    %40 = vst [vmem:[#allocation5 + $0x8] sm:$0xff] %v38
    // Predicated region
    $region10: #{tpu_custom_call.1} parent=1 // pred_check
      _
    $region11: #{tpu_custom_call.1} parent=1 // pred_check_branch
      %42 = sbr.rel (0) target = $region13
    $region12: #{tpu_custom_call.1} parent=1 // pred_region
      %s44 = ssub.s32 256, 256
      %45 = vsyncadd [#allocation4], %s44
      %s47 = sshll.u32 [#allocation5], 4
      %s48 = int_to_ptr.vmem [resolvable:$true] %s47
      %50 = dma.vmem_to_hbm [thread:$0]  %s48, 256, %s1, [#allocation4]
    $region13: #{tpu_custom_call.1} parent=1 // pred_fallthru
      _
    // Predicated region
    $region14: #{tpu_custom_call.1} parent=1 // pred_check
      _
    $region15: #{tpu_custom_call.1} parent=1 // pred_check_branch
      %52 = sbr.rel (0) target = $region17
    $region16: #{tpu_custom_call.1} parent=1 // pred_region
      %53 = dma.done [#allocation4], 256
    $region17: #{tpu_custom_call.1} parent=1 // pred_fallthru
      _
    %54 = vsyncpa [#allocation3], 1
    %55 = vsyncpa [#allocation4], 1

</llo_original>
